<compile_context>
chip_gen: v7x
topology: tpu7x:2x2x1
jax: 0.10.0
libtpu: 0.0.40
codegen_flags: <defaults>
</compile_context>

<pallas_src>
import functools

import jax
import jax.numpy as jnp
from jax.experimental import pallas as pl
from jax.experimental.pallas import tpu as pltpu


def _round_up(v, m):
    return (v + m - 1) // m * m


def decoder_kernel(x_ref, w_ref, b_ref, o_ref, *, latent_pad):
    # x_ref: (tb, latent_pad) bf16    w_ref: (3, D, D) bf16
    # b_ref: (3, 1, D) f32            o_ref: (tb, D) out_dtype
    cd = w_ref.dtype

    # ---- linear_1 + ReLU (contract only the real, 16-aligned input features) ----
    h = jnp.dot(x_ref[...], w_ref[0, :latent_pad, :],
                preferred_element_type=jnp.float32)
    h = jnp.maximum(h + b_ref[0], 0.0)
    # ---- linear_2 + ReLU ----
    h = jnp.dot(h.astype(cd), w_ref[1], preferred_element_type=jnp.float32)
    h = jnp.maximum(h + b_ref[1], 0.0)
    # ---- linear_3 + Sigmoid ----
    h = jnp.dot(h.astype(cd), w_ref[2], preferred_element_type=jnp.float32)
    h = h + b_ref[2]
    o_ref[...] = jax.nn.sigmoid(h).astype(o_ref.dtype)


def pack_decoder_params(params, compute_dtype=jnp.bfloat16):
    """Pack/pad the three Linear layers into 2 DMA-friendly resident buffers.

    Weights are stored as (in_features, out_features) (i.e. PyTorch weight.T),
    zero-padded to a common lane-aligned size D (multiple of 128).  Padded
    lanes of the hidden activations stay exactly zero through ReLU and
    contribute nothing downstream.  Biases are packed as (3, 1, D) f32 so each
    layer's bias is a single lane-aligned tile.
    """
    ws = [params["w1"], params["w2"], params["w3"]]
    bs = [params["b1"], params["b2"], params["b3"]]
    D = max(_round_up(int(d), 128) for w in ws for d in w.shape)

    w_packed = jnp.zeros((3, D, D), compute_dtype)
    b_packed = jnp.zeros((3, 1, D), jnp.float32)
    for i, (w, b) in enumerate(zip(ws, bs)):
        fi, fo = w.shape
        w_packed = w_packed.at[i, :fi, :fo].set(w.astype(compute_dtype))
        b_packed = b_packed.at[i, 0, :fo].set(b.astype(jnp.float32))

    latent = int(ws[0].shape[0])
    return {
        "w": w_packed,
        "b": b_packed,
        "D": D,
        "latent": latent,
        "latent_pad": min(D, _round_up(latent, 16)),  # bf16 sublane-aligned
        "out": int(ws[2].shape[1]),
        "dtype": compute_dtype,
    }


def decoder_forward(x, packed, *, block_b=2048, out_dtype=jnp.bfloat16):
    """x: (B, latent_size) float32.  packed: output of pack_decoder_params.

    Returns (B, output_size) in out_dtype (bf16 by default to halve the
    dominant HBM writeback stream; pass jnp.float32 for exact module dtype).
    """
    w_packed, b_packed = packed["w"], packed["b"]
    D = packed["D"]
    latent, latent_pad = packed["latent"], packed["latent_pad"]
    out_features = packed["out"]
    cd = packed["dtype"]

    B = x.shape[0]

    # --- batch tiling: bounded padding (<16 rows/tile), >=2 tiles for large B
    # so ("parallel",) actually shards across v7x's 2 TensorCores. ---
    n_tiles = max(1, pl.cdiv(B, block_b))
    if n_tiles == 1 and B >= 32:
        n_tiles = 2
    tb = _round_up(pl.cdiv(B, n_tiles), 16)   # multiple of 16 (bf16 packing)
    Bp = n_tiles * tb

    # Minimal padding only: batch rows to Bp, latent lanes to latent_pad.
    xp = x.astype(cd)
    if (Bp, latent_pad) != (B, latent):
        xp = jnp.pad(xp, ((0, Bp - B), (0, latent_pad - latent)))

    flops = 2 * Bp * D * (latent_pad + 2 * D)
    transcendentals = 2 * Bp * D  # sigmoid ~ exp + reciprocal per element
    bytes_accessed = (xp.size * xp.dtype.itemsize
                      + w_packed.size * w_packed.dtype.itemsize
                      + b_packed.size * b_packed.dtype.itemsize
                      + Bp * D * jnp.dtype(out_dtype).itemsize)

    out = pl.pallas_call(
        functools.partial(decoder_kernel, latent_pad=latent_pad),
        out_shape=jax.ShapeDtypeStruct((Bp, D), out_dtype),
        grid=(n_tiles,),
        in_specs=[
            # x: tiled over batch, narrow (latent_pad) lane footprint
            pl.BlockSpec((tb, latent_pad), lambda i: (i, 0)),
            # weights / biases: constant index_map -> VMEM-resident
            pl.BlockSpec((3, D, D), lambda i: (0, 0, 0)),
            pl.BlockSpec((3, 1, D), lambda i: (0, 0, 0)),
        ],
        out_specs=pl.BlockSpec((tb, D), lambda i: (i, 0)),
        compiler_params=pltpu.CompilerParams(
            dimension_semantics=("parallel",)),
        cost_estimate=pl.CostEstimate(
            flops=flops, transcendentals=transcendentals,
            bytes_accessed=bytes_accessed),
    )(xp, w_packed, b_packed)

    # Mandatory slice: padded lanes hold sigmoid(0)=0.5, padded rows are junk.
    return out[:B, :out_features]


def init_params(key, latent_size, output_size):
    """Deterministic init mimicking torch.nn.Linear (uniform +/- 1/sqrt(fan_in)).

    Weights stored as (in_features, out_features) = PyTorch weight.T,
    biases as (out_features,).
    """
    h1 = output_size // 4
    h2 = output_size // 2
    dims = [(latent_size, h1), (h1, h2), (h2, output_size)]
    params = {}
    for idx, (fan_in, fan_out) in enumerate(dims, start=1):
        key, kw, kb = jax.random.split(key, 3)
        bound = 1.0 / (fan_in ** 0.5)
        params[f"w{idx}"] = jax.random.uniform(
            kw, (fan_in, fan_out), jnp.float32, minval=-bound, maxval=bound)
        params[f"b{idx}"] = jax.random.uniform(
            kb, (fan_out,), jnp.float32, minval=-bound, maxval=bound)
    return params


if __name__ == "__main__":
    latent_size = 16
    output_size = 128   # -> hidden dims 32 and 64
    batch = 8

    key = jax.random.PRNGKey(0)
    key, kx = jax.random.split(key)
    x = jax.random.normal(kx, (batch, latent_size), jnp.float32)
    params = init_params(key, latent_size, output_size)

    packed = pack_decoder_params(params)          # hoisted out of the hot path
    out = decoder_forward(x, packed)              # bf16 output by default
    out = jax.block_until_ready(out)
    assert out.shape == (batch, output_size)
    assert out.dtype == jnp.bfloat16

    out_f32 = out.astype(jnp.float32)

    # --- matched-precision reference (bf16 weights/activations, f32 accumulate,
    #     bf16 output cast) ---
    cd = jnp.bfloat16
    h = jnp.dot(x.astype(cd), params["w1"].astype(cd),
                preferred_element_type=jnp.float32) + params["b1"]
    h = jnp.maximum(h, 0.0)
    h = jnp.dot(h.astype(cd), params["w2"].astype(cd),
                preferred_element_type=jnp.float32) + params["b2"]
    h = jnp.maximum(h, 0.0)
    h = jnp.dot(h.astype(cd), params["w3"].astype(cd),
                preferred_element_type=jnp.float32) + params["b3"]
    ref_bf16 = jax.nn.sigmoid(h).astype(cd).astype(jnp.float32)
    assert jnp.allclose(out_f32, ref_bf16, atol=1e-2, rtol=1e-2), \
        float(jnp.max(jnp.abs(out_f32 - ref_bf16)))

    # --- full-f32 reference (original module semantics), loose tolerance for
    #     the bf16 weight/activation/output quantization ---
    h = jnp.maximum(x @ params["w1"] + params["b1"], 0.0)
    h = jnp.maximum(h @ params["w2"] + params["b2"], 0.0)
    ref_f32 = jax.nn.sigmoid(h @ params["w3"] + params["b3"])
    assert jnp.allclose(out_f32, ref_f32, atol=5e-2), \
        float(jnp.max(jnp.abs(out_f32 - ref_f32)))

    print("KERNEL_OK")
</pallas_src>

<mosaic_0001>
module attributes {stable_mosaic.version = 11 : i64} {
  func.func @decoder_kernel(%arg0: i32, %arg1: memref<16x16xbf16, #tpu.memory_space<vmem>>, %arg2: memref<3x128x128xbf16, #tpu.memory_space<vmem>>, %arg3: memref<3x1x128xf32, #tpu.memory_space<vmem>>, %arg4: memref<16x128xbf16, #tpu.memory_space<vmem>>) attributes {dimension_semantics = [#tpu.dimension_semantics<parallel>], iteration_bounds = array<i64: 1>, scalar_prefetch = 0 : i64, scratch_operands = 0 : i64, tpu.core_type = #tpu.core_type<tc>, window_params = [{transform_indices = @transform_0, window_bounds = array<i64: 16, 16>}, {pipeline_mode = #tpu.pipeline_mode<synchronous>, transform_indices = @transform_1, window_bounds = array<i64: 3, 128, 128>}, {pipeline_mode = #tpu.pipeline_mode<synchronous>, transform_indices = @transform_2, window_bounds = array<i64: 3, 1, 128>}, {transform_indices = @transform_3, window_bounds = array<i64: 16, 128>}]} {
    %c0 = arith.constant 0 : index
    %c0_0 = arith.constant 0 : index
    %0 = vector.load %arg1[%c0, %c0_0] : memref<16x16xbf16, #tpu.memory_space<vmem>>, vector<16x16xbf16>
    %c0_1 = arith.constant 0 : index
    %c0_2 = arith.constant 0 : index
    %c0_3 = arith.constant 0 : index
    %1 = vector.load %arg2[%c0_1, %c0_2, %c0_3] : memref<3x128x128xbf16, #tpu.memory_space<vmem>>, vector<1x16x128xbf16>
    %2 = vector.shape_cast %1 : vector<1x16x128xbf16> to vector<16x128xbf16>
    %cst = arith.constant dense<0.000000e+00> : vector<16x128xf32>
    %3 = tpu.matmul %0, %2, %cst {dimension_numbers = #tpu.dot_dimension_numbers<[1], [0], [0], [1], [0, 0, 1, 1], [], []>} : vector<16x16xbf16>, vector<16x128xbf16>, vector<16x128xf32> -> vector<16x128xf32>
    %c0_4 = arith.constant 0 : index
    %c0_5 = arith.constant 0 : index
    %c0_6 = arith.constant 0 : index
    %4 = vector.load %arg3[%c0_4, %c0_5, %c0_6] : memref<3x1x128xf32, #tpu.memory_space<vmem>>, vector<1x1x128xf32>
    %5 = vector.shape_cast %4 : vector<1x1x128xf32> to vector<1x128xf32>
    %6 = vector.broadcast %5 : vector<1x128xf32> to vector<16x128xf32>
    %7 = arith.addf %3, %6 : vector<16x128xf32>
    %cst_7 = arith.constant 0.000000e+00 : f32
    %8 = vector.broadcast %cst_7 : f32 to vector<16x128xf32>
    %9 = arith.maximumf %7, %8 : vector<16x128xf32>
    %10 = arith.truncf %9 : vector<16x128xf32> to vector<16x128xbf16>
    %c1 = arith.constant 1 : index
    %c0_8 = arith.constant 0 : index
    %c0_9 = arith.constant 0 : index
    %11 = vector.load %arg2[%c1, %c0_8, %c0_9] : memref<3x128x128xbf16, #tpu.memory_space<vmem>>, vector<1x128x128xbf16>
    %12 = vector.shape_cast %11 : vector<1x128x128xbf16> to vector<128x128xbf16>
    %cst_10 = arith.constant dense<0.000000e+00> : vector<16x128xf32>
    %13 = tpu.matmul %10, %12, %cst_10 {dimension_numbers = #tpu.dot_dimension_numbers<[1], [0], [0], [1], [0, 0, 1, 1], [], []>} : vector<16x128xbf16>, vector<128x128xbf16>, vector<16x128xf32> -> vector<16x128xf32>
    %c1_11 = arith.constant 1 : index
    %c0_12 = arith.constant 0 : index
    %c0_13 = arith.constant 0 : index
    %14 = vector.load %arg3[%c1_11, %c0_12, %c0_13] : memref<3x1x128xf32, #tpu.memory_space<vmem>>, vector<1x1x128xf32>
    %15 = vector.shape_cast %14 : vector<1x1x128xf32> to vector<1x128xf32>
    %16 = vector.broadcast %15 : vector<1x128xf32> to vector<16x128xf32>
    %17 = arith.addf %13, %16 : vector<16x128xf32>
    %cst_14 = arith.constant 0.000000e+00 : f32
    %18 = vector.broadcast %cst_14 : f32 to vector<16x128xf32>
    %19 = arith.maximumf %17, %18 : vector<16x128xf32>
    %20 = arith.truncf %19 : vector<16x128xf32> to vector<16x128xbf16>
    %c2 = arith.constant 2 : index
    %c0_15 = arith.constant 0 : index
    %c0_16 = arith.constant 0 : index
    %21 = vector.load %arg2[%c2, %c0_15, %c0_16] : memref<3x128x128xbf16, #tpu.memory_space<vmem>>, vector<1x128x128xbf16>
    %22 = vector.shape_cast %21 : vector<1x128x128xbf16> to vector<128x128xbf16>
    %cst_17 = arith.constant dense<0.000000e+00> : vector<16x128xf32>
    %23 = tpu.matmul %20, %22, %cst_17 {dimension_numbers = #tpu.dot_dimension_numbers<[1], [0], [0], [1], [0, 0, 1, 1], [], []>} : vector<16x128xbf16>, vector<128x128xbf16>, vector<16x128xf32> -> vector<16x128xf32>
    %c2_18 = arith.constant 2 : index
    %c0_19 = arith.constant 0 : index
    %c0_20 = arith.constant 0 : index
    %24 = vector.load %arg3[%c2_18, %c0_19, %c0_20] : memref<3x1x128xf32, #tpu.memory_space<vmem>>, vector<1x1x128xf32>
    %25 = vector.shape_cast %24 : vector<1x1x128xf32> to vector<1x128xf32>
    %26 = vector.broadcast %25 : vector<1x128xf32> to vector<16x128xf32>
    %27 = arith.addf %23, %26 : vector<16x128xf32>
    %28 = arith.negf %27 : vector<16x128xf32>
    %29 = math.exp %28 : vector<16x128xf32>
    %cst_21 = arith.constant 1.000000e+00 : f32
    %30 = vector.broadcast %cst_21 : f32 to vector<16x128xf32>
    %31 = arith.addf %30, %29 : vector<16x128xf32>
    %32 = arith.divf %30, %31 : vector<16x128xf32>
    %33 = arith.truncf %32 : vector<16x128xf32> to vector<16x128xbf16>
    %c0_22 = arith.constant 0 : index
    %c0_23 = arith.constant 0 : index
    %34 = vector.load %arg4[%c0_22, %c0_23] : memref<16x128xbf16, #tpu.memory_space<vmem>>, vector<16x128xbf16>
    tpu.vector_store %arg4[%c0_22, %c0_23], %33 {strides = array<i32>} : memref<16x128xbf16, #tpu.memory_space<vmem>>, vector<16x128xbf16>,
    return
  }
  func.func @transform_0(%arg0: i32) -> (i32, i32) {
    %c0_i32 = arith.constant 0 : i32
    %c0_i32_0 = arith.constant 0 : i32
    return %arg0, %c0_i32 : i32, i32
  }
  func.func @transform_1(%arg0: i32) -> (i32, i32, i32) {
    %c0_i32 = arith.constant 0 : i32
    %c0_i32_0 = arith.constant 0 : i32
    %c0_i32_1 = arith.constant 0 : i32
    %c0_i32_2 = arith.constant 0 : i32
    return %c0_i32, %c0_i32_0, %c0_i32_1 : i32, i32, i32
  }
  func.func @transform_2(%arg0: i32) -> (i32, i32, i32) {
    %c0_i32 = arith.constant 0 : i32
    %c0_i32_0 = arith.constant 0 : i32
    %c0_i32_1 = arith.constant 0 : i32
    %c0_i32_2 = arith.constant 0 : i32
    return %c0_i32, %c0_i32_0, %c0_i32_1 : i32, i32, i32
  }
  func.func @transform_3(%arg0: i32) -> (i32, i32) {
    %c0_i32 = arith.constant 0 : i32
    %c0_i32_0 = arith.constant 0 : i32
    return %arg0, %c0_i32 : i32, i32
  }
}

</mosaic_0001>

<llo_original>
// kernel: tpu_custom_call.1
$region0: #{tpu_custom_call.1}
  #allocation0 [shape = 'u32[]', space=smem, size = 0x4, offset = 0x4, fixed_abs, tag = 'smem constant byte address 0x4 - core index']
  #allocation1 [shape = 'u32[144,128]{1,0:T(1,128)}', space=vmem, size = 0x12000, scoped, tag = 'internal scratch']
  %s0 = inlined_call_operand.hbm [shape: bf16[16,16], index: 0, kind: input, shape index: {}]
  %s1 = inlined_call_operand.hbm [shape: bf16[3,128,128], index: 1, kind: input, shape index: {}]
  %s2 = inlined_call_operand.vmem [shape: f32[3,1,128], index: 2, kind: input, shape index: {}]
  %s3 = inlined_call_operand.hbm [shape: bf16[16,128], index: 3, kind: output, shape index: {}]
  %s4 = sld [smem:[#allocation0]]
  $region30: #{tpu_custom_call.1} parent=0
    _
  %s6 = ssub.s32 1, %s4
  %s7 = scalar_select 0, %s6, %s4
  $region1: #{tpu_custom_call.1} parent=0
    #allocation2 [shape = 'u8[4096]{0}', space=vmem, size = 0x1000, scoped, tag = 'input window, operand 0, single buffered']
    #allocation3 [shape = 's32[1]{0}', space=sflag, size = 0x4, scoped, tag = 'scoped memory for tpu_custom_call.1']
    #allocation4 [shape = 's32[1]{0}', space=sflag, size = 0x4, scoped, tag = 'scoped memory for tpu_custom_call.1']
    #allocation5 [shape = 'u8[98304]{0}', space=vmem, size = 0x18000, scoped, tag = 'input window, operand 1, single buffered']
    #allocation6 [shape = 's32[1]{0}', space=sflag, size = 0x4, scoped, tag = 'scoped memory for tpu_custom_call.1']
    #allocation7 [shape = 'u8[4096]{0}', space=vmem, size = 0x1000, scoped, tag = 'output window, operand 0, single buffered']
    %8 = vsyncpa [#allocation3], 0
    %9 = vsyncpa [#allocation6], 0
    %10 = vsyncpa [#allocation4], 0
    // Predicated region
    $region2: #{tpu_custom_call.1} parent=1 // pred_check
      _
    $region3: #{tpu_custom_call.1} parent=1 // pred_check_branch
      %12 = sbr.rel (0) target = $region5
    $region4: #{tpu_custom_call.1} parent=1 // pred_region
      %s14 = ssub.s32 128, 128
      %15 = vsyncadd [#allocation3], %s14
      %s16 = sshll.u32 [#allocation2], 4
      %s17 = int_to_ptr.vmem [resolvable:$true] %s16
      %22 = dma.hbm_to_vmem [thread:$0]  %s0, 128, %s17, [#allocation3], 64, 64, 4
    $region5: #{tpu_custom_call.1} parent=1 // pred_fallthru
      _
    // Predicated region
    $region6: #{tpu_custom_call.1} parent=1 // pred_check
      _
    $region7: #{tpu_custom_call.1} parent=1 // pred_check_branch
      %24 = sbr.rel (0) target = $region9
    $region8: #{tpu_custom_call.1} parent=1 // pred_region
      %s26 = ssub.s32 3072, 3072
      %27 = vsyncadd [#allocation6], %s26
      %s28 = sshll.u32 [#allocation5], 4
      %s29 = int_to_ptr.vmem [resolvable:$true] %s28
      %34 = dma.hbm_to_vmem [thread:$0]  %s1, 3072, %s29, [#allocation6], 64, 64, 4
    $region9: #{tpu_custom_call.1} parent=1 // pred_fallthru
      _
    // Predicated region
    $region10: #{tpu_custom_call.1} parent=1 // pred_check
      _
    $region11: #{tpu_custom_call.1} parent=1 // pred_check_branch
      %36 = sbr.rel (0) target = $region13
    $region12: #{tpu_custom_call.1} parent=1 // pred_region
      _
    $region13: #{tpu_custom_call.1} parent=1 // pred_fallthru
      _
    // Predicated region
    $region14: #{tpu_custom_call.1} parent=1 // pred_check
      _
    $region15: #{tpu_custom_call.1} parent=1 // pred_check_branch
      %38 = sbr.rel (0) target = $region17
    $region16: #{tpu_custom_call.1} parent=1 // pred_region
      %39 = dma.done [#allocation3], 128
    $region17: #{tpu_custom_call.1} parent=1 // pred_fallthru
      _
    // Predicated region
    $region18: #{tpu_custom_call.1} parent=1 // pred_check
      _
    $region19: #{tpu_custom_call.1} parent=1 // pred_check_branch
      %41 = sbr.rel (0) target = $region21
    $region20: #{tpu_custom_call.1} parent=1 // pred_region
      %42 = dma.done [#allocation6], 3072
    $region21: #{tpu_custom_call.1} parent=1 // pred_fallthru
      _
    %v44 = vld [vmem:[#allocation2] sm:$0xf]
    %v45 = vld [vmem:[#allocation2 + $0x4] sm:$0xf]
    %v46 = vld [vmem:[#allocation5] sm:$0xf]
    %v47 = vld [vmem:[#allocation5 + $0x4] sm:$0xf]
    %v48 = vld [vmem:[%s2] sm:$0x1]
    %v50 = vlaneseq
    %v51 = vshrl.u32 %v50, 7
    %v52 = vsub.s32 0, %v51
    %v53 = vrot.slane %v48, %v52
    %v57 = vunpack.c.l.b16 %v44
    %v58 = vunpack.c.l.b16 %v45
    %v59 = vpack.c.b16 %v58, %v57
    %v62 = vunpack.c.l.b16 %v46
    %v63 = vunpack.c.l.b16 %v47
    %v64 = vpack.c.b16 %v63, %v62
    %vm66 = vcmask 130048
    %v68 = vsel %vm66, %v59, 0
    %70 = vmatprep.subr.bf16.mxu0 0
    %71 = vmatpush1.bf16.msra.mxu0 %v64
    %72 = vmatprep.subr.bf16.mxu0 0
    %73 = vmatpush1.bf16.msra.mxu0 0
    %74 = vmatprep.subr.bf16.mxu0 0
    %75 = vmatpush1.bf16.msra.mxu0 0
    %76 = vmatprep.subr.bf16.mxu0 0
    %77 = vmatpush1.bf16.msra.mxu0 0
    %78 = vmatprep.subr.bf16.mxu0 0
    %79 = vmatpush1.bf16.msra.mxu0 0
    %80 = vmatprep.subr.bf16.mxu0 0
    %81 = vmatpush1.bf16.msra.mxu0 0
    %82 = vmatprep.subr.bf16.mxu0 0
    %83 = vmatpush1.bf16.msra.mxu0 0
    %84 = vmatprep.subr.bf16.mxu0 0
    %85 = vmatpush1.bf16.msra.mxu0 0
    %86 = vmatprep.subr.bf16.mxu0 0
    %87 = vmatpush1.bf16.msra.mxu0 0
    %88 = vmatprep.subr.bf16.mxu0 0
    %89 = vmatpush1.bf16.msra.mxu0 0
    %90 = vmatprep.subr.bf16.mxu0 0
    %91 = vmatpush1.bf16.msra.mxu0 0
    %92 = vmatprep.subr.bf16.mxu0 0
    %93 = vmatpush1.bf16.msra.mxu0 0
    %94 = vmatprep.subr.bf16.mxu0 0
    %95 = vmatpush1.bf16.msra.mxu0 0
    %96 = vmatprep.subr.bf16.mxu0 0
    %97 = vmatpush1.bf16.msra.mxu0 0
    %98 = vmatprep.subr.bf16.mxu0 0
    %99 = vmatpush1.bf16.msra.mxu0 0
    %100 = vmatprep.subr.bf16.mxu0 0
    %101 = vmatpush1.bf16.msra.mxu0 0
    %102 = vmatprep.mubr.bf16.mxu0 0
    %103 = vmatmul.mubr.bf16.gmra.mrb[0].mxu0 %v68
    %v104 = vpop.f32.mrb[0].mxu0
    %v105 = vadd.f32 %v53, %v104
    %v106 = vpop.f32.mrb[0].mxu0
    %v107 = vpop.f32.mrb[0].mxu0
    %v108 = vadd.f32 %v53, %v107
    %v109 = vpop.f32.mrb[0].mxu0
    %110 = vdwg.mxu0
    %v111 = vmax.f32 %v105, 0.0
    %v112 = vmax.f32 %v108, 0.0
    %v113 = vpack.c.bf16 %v112, %v111
    %s114 = scalar_lea.vmem [#allocation5], 64
    %v115 = vld [vmem:[%s114] sm:$0xf]
    %v116 = vld [vmem:[%s114 + $0x4] sm:$0xf]
    %v117 = vld [vmem:[%s114 + $0x8] sm:$0xf]
    %v118 = vld [vmem:[%s114 + $0xc] sm:$0xf]
    %v119 = vld [vmem:[%s114 + $0x10] sm:$0xf]
    %v120 = vld [vmem:[%s114 + $0x14] sm:$0xf]
    %v121 = vld [vmem:[%s114 + $0x18] sm:$0xf]
    %v122 = vld [vmem:[%s114 + $0x1c] sm:$0xf]
    %v123 = vld [vmem:[%s114 + $0x20] sm:$0xf]
    %v124 = vld [vmem:[%s114 + $0x24] sm:$0xf]
    %v125 = vld [vmem:[%s114 + $0x28] sm:$0xf]
    %v126 = vld [vmem:[%s114 + $0x2c] sm:$0xf]
    %v127 = vld [vmem:[%s114 + $0x30] sm:$0xf]
    %v128 = vld [vmem:[%s114 + $0x34] sm:$0xf]
    %v129 = vld [vmem:[%s114 + $0x38] sm:$0xf]
    %v130 = vld [vmem:[%s114 + $0x3c] sm:$0xf]
    %s131 = scalar_lea.vmem %s2, 1
    %v132 = vld [vmem:[%s131] sm:$0x1]
    %v134 = vlaneseq
    %v135 = vshrl.u32 %v134, 7
    %v136 = vsub.s32 0, %v135
    %v137 = vrot.slane %v132, %v136
    %v155 = vunpack.c.l.b16 %v115
    %v156 = vunpack.c.l.b16 %v116
    %v157 = vunpack.c.l.b16 %v117
    %v158 = vunpack.c.l.b16 %v118
    %v159 = vunpack.c.l.b16 %v119
    %v160 = vunpack.c.l.b16 %v120
    %v161 = vunpack.c.l.b16 %v121
    %v162 = vunpack.c.l.b16 %v122
    %v163 = vunpack.c.l.b16 %v123
    %v164 = vunpack.c.l.b16 %v124
    %v165 = vunpack.c.l.b16 %v125
    %v166 = vunpack.c.l.b16 %v126
    %v167 = vunpack.c.l.b16 %v127
    %v168 = vunpack.c.l.b16 %v128
    %v169 = vunpack.c.l.b16 %v129
    %v170 = vunpack.c.l.b16 %v130
    %v171 = vpack.c.b16 %v156, %v155
    %v172 = vpack.c.b16 %v158, %v157
    %v173 = vpack.c.b16 %v160, %v159
    %v174 = vpack.c.b16 %v162, %v161
    %v175 = vpack.c.b16 %v164, %v163
    %v176 = vpack.c.b16 %v166, %v165
    %v177 = vpack.c.b16 %v168, %v167
    %v178 = vpack.c.b16 %v170, %v169
    %187 = vmatprep.subr.bf16.mxu0 0
    %188 = vmatpush1.bf16.msra.mxu0 %v171
    %189 = vmatprep.subr.bf16.mxu0 0
    %190 = vmatpush1.bf16.msra.mxu0 %v172
    %191 = vmatprep.subr.bf16.mxu0 0
    %192 = vmatpush1.bf16.msra.mxu0 %v173
    %193 = vmatprep.subr.bf16.mxu0 0
    %194 = vmatpush1.bf16.msra.mxu0 %v174
    %195 = vmatprep.subr.bf16.mxu0 0
    %196 = vmatpush1.bf16.msra.mxu0 %v175
    %197 = vmatprep.subr.bf16.mxu0 0
    %198 = vmatpush1.bf16.msra.mxu0 %v176
    %199 = vmatprep.subr.bf16.mxu0 0
    %200 = vmatpush1.bf16.msra.mxu0 %v177
    %201 = vmatprep.subr.bf16.mxu0 0
    %202 = vmatpush1.bf16.msra.mxu0 %v178
    %203 = vmatprep.subr.bf16.mxu0 0
    %204 = vmatpush1.bf16.msra.mxu0 0
    %205 = vmatprep.subr.bf16.mxu0 0
    %206 = vmatpush1.bf16.msra.mxu0 0
    %207 = vmatprep.subr.bf16.mxu0 0
    %208 = vmatpush1.bf16.msra.mxu0 0
    %209 = vmatprep.subr.bf16.mxu0 0
    %210 = vmatpush1.bf16.msra.mxu0 0
    %211 = vmatprep.subr.bf16.mxu0 0
    %212 = vmatpush1.bf16.msra.mxu0 0
    %213 = vmatprep.subr.bf16.mxu0 0
    %214 = vmatpush1.bf16.msra.mxu0 0
    %215 = vmatprep.subr.bf16.mxu0 0
    %216 = vmatpush1.bf16.msra.mxu0 0
    %217 = vmatprep.subr.bf16.mxu0 0
    %218 = vmatpush1.bf16.msra.mxu0 0
    %219 = vmatprep.mubr.bf16.mxu0 0
    %220 = vmatmul.mubr.bf16.gmra.mrb[0].mxu0 %v113
    %v221 = vpop.f32.mrb[0].mxu0
    %v222 = vadd.f32 %v137, %v221
    %v223 = vpop.f32.mrb[0].mxu0
    %v224 = vpop.f32.mrb[0].mxu0
    %v225 = vadd.f32 %v137, %v224
    %v226 = vpop.f32.mrb[0].mxu0
    %227 = vdwg.mxu0
    %v228 = vmax.f32 %v222, 0.0
    %v229 = vmax.f32 %v225, 0.0
    %v230 = vpack.c.bf16 %v229, %v228
    %s231 = scalar_lea.vmem [#allocation5], 128
    %v232 = vld [vmem:[%s231] sm:$0xf]
    %v233 = vld [vmem:[%s231 + $0x4] sm:$0xf]
    %v234 = vld [vmem:[%s231 + $0x8] sm:$0xf]
    %v235 = vld [vmem:[%s231 + $0xc] sm:$0xf]
    %v236 = vld [vmem:[%s231 + $0x10] sm:$0xf]
    %v237 = vld [vmem:[%s231 + $0x14] sm:$0xf]
    %v238 = vld [vmem:[%s231 + $0x18] sm:$0xf]
    %v239 = vld [vmem:[%s231 + $0x1c] sm:$0xf]
    %v240 = vld [vmem:[%s231 + $0x20] sm:$0xf]
    %v241 = vld [vmem:[%s231 + $0x24] sm:$0xf]
    %v242 = vld [vmem:[%s231 + $0x28] sm:$0xf]
    %v243 = vld [vmem:[%s231 + $0x2c] sm:$0xf]
    %v244 = vld [vmem:[%s231 + $0x30] sm:$0xf]
    %v245 = vld [vmem:[%s231 + $0x34] sm:$0xf]
    %v246 = vld [vmem:[%s231 + $0x38] sm:$0xf]
    %v247 = vld [vmem:[%s231 + $0x3c] sm:$0xf]
    %s248 = scalar_lea.vmem %s2, 2
    %v249 = vld [vmem:[%s248] sm:$0x1]
    %v251 = vlaneseq
    %v252 = vshrl.u32 %v251, 7
    %v253 = vsub.s32 0, %v252
    %v254 = vrot.slane %v249, %v253
    %v272 = vunpack.c.l.b16 %v232
    %v273 = vunpack.c.l.b16 %v233
    %v274 = vunpack.c.l.b16 %v234
    %v275 = vunpack.c.l.b16 %v235
    %v276 = vunpack.c.l.b16 %v236
    %v277 = vunpack.c.l.b16 %v237
    %v278 = vunpack.c.l.b16 %v238
    %v279 = vunpack.c.l.b16 %v239
    %v280 = vunpack.c.l.b16 %v240
    %v281 = vunpack.c.l.b16 %v241
    %v282 = vunpack.c.l.b16 %v242
    %v283 = vunpack.c.l.b16 %v243
    %v284 = vunpack.c.l.b16 %v244
    %v285 = vunpack.c.l.b16 %v245
    %v286 = vunpack.c.l.b16 %v246
    %v287 = vunpack.c.l.b16 %v247
    %v288 = vpack.c.b16 %v273, %v272
    %v289 = vpack.c.b16 %v275, %v274
    %v290 = vpack.c.b16 %v277, %v276
    %v291 = vpack.c.b16 %v279, %v278
    %v292 = vpack.c.b16 %v281, %v280
    %v293 = vpack.c.b16 %v283, %v282
    %v294 = vpack.c.b16 %v285, %v284
    %v295 = vpack.c.b16 %v287, %v286
    %304 = vmatprep.subr.bf16.mxu0 0
    %305 = vmatpush1.bf16.msra.mxu0 %v288
    %306 = vmatprep.subr.bf16.mxu0 0
    %307 = vmatpush1.bf16.msra.mxu0 %v289
    %308 = vmatprep.subr.bf16.mxu0 0
    %309 = vmatpush1.bf16.msra.mxu0 %v290
    %310 = vmatprep.subr.bf16.mxu0 0
    %311 = vmatpush1.bf16.msra.mxu0 %v291
    %312 = vmatprep.subr.bf16.mxu0 0
    %313 = vmatpush1.bf16.msra.mxu0 %v292
    %314 = vmatprep.subr.bf16.mxu0 0
    %315 = vmatpush1.bf16.msra.mxu0 %v293
    %316 = vmatprep.subr.bf16.mxu0 0
    %317 = vmatpush1.bf16.msra.mxu0 %v294
    %318 = vmatprep.subr.bf16.mxu0 0
    %319 = vmatpush1.bf16.msra.mxu0 %v295
    %320 = vmatprep.subr.bf16.mxu0 0
    %321 = vmatpush1.bf16.msra.mxu0 0
    %322 = vmatprep.subr.bf16.mxu0 0
    %323 = vmatpush1.bf16.msra.mxu0 0
    %324 = vmatprep.subr.bf16.mxu0 0
    %325 = vmatpush1.bf16.msra.mxu0 0
    %326 = vmatprep.subr.bf16.mxu0 0
    %327 = vmatpush1.bf16.msra.mxu0 0
    %328 = vmatprep.subr.bf16.mxu0 0
    %329 = vmatpush1.bf16.msra.mxu0 0
    %330 = vmatprep.subr.bf16.mxu0 0
    %331 = vmatpush1.bf16.msra.mxu0 0
    %332 = vmatprep.subr.bf16.mxu0 0
    %333 = vmatpush1.bf16.msra.mxu0 0
    %334 = vmatprep.subr.bf16.mxu0 0
    %335 = vmatpush1.bf16.msra.mxu0 0
    %336 = vmatprep.mubr.bf16.mxu0 0
    %337 = vmatmul.mubr.bf16.gmra.mrb[0].mxu0 %v230
    %v338 = vpop.f32.mrb[0].mxu0
    %v339 = vadd.f32 %v254, %v338
    %v340 = vpop.f32.mrb[0].mxu0
    %v341 = vpop.f32.mrb[0].mxu0
    %v342 = vadd.f32 %v254, %v341
    %v343 = vpop.f32.mrb[0].mxu0
    %344 = vdwg.mxu0
    %v345 = vxor.u32 %v339, 2147483648
    %v346 = vxor.u32 %v342, 2147483648
    %v347 = vmul.f32 %v345, 1.442695
    %v348 = vpow.pop %v347
    %v349 = vmul.f32 %v346, 1.442695
    %v350 = vpow.pop %v349
    %v351 = vadd.f32 %v348, 1.0
    %v352 = vadd.f32 %v350, 1.0
    %v353 = vrcp.pop %v351
    %v354 = vmul.f32 1.0, %v353
    %v355 = vrcp.pop %v352
    %v356 = vmul.f32 1.0, %v355
    %v357 = vpack.c.bf16 %v356, %v354
    %v359 = vunpack.c.l.b16 %v357
    %v360 = vunpack.c.h.b16 %v357
    %v361 = vpack.c.b16 %v359, %v359
    %v362 = vpack.c.b16 %v360, %v360
    %365 = vst [vmem:[#allocation7] sm:$0xf] %v361
    %366 = vst [vmem:[#allocation7 + $0x4] sm:$0xf] %v362
    // Predicated region
    $region22: #{tpu_custom_call.1} parent=1 // pred_check
      _
    $region23: #{tpu_custom_call.1} parent=1 // pred_check_branch
      %368 = sbr.rel (0) target = $region25
    $region24: #{tpu_custom_call.1} parent=1 // pred_region
      %s370 = ssub.s32 128, 128
      %371 = vsyncadd [#allocation4], %s370
      %s372 = sshll.u32 [#allocation7], 4
      %s373 = int_to_ptr.vmem [resolvable:$true] %s372
      %378 = dma.vmem_to_hbm [thread:$0]  %s373, 128, %s3, [#allocation4], 64, 64, 4
    $region25: #{tpu_custom_call.1} parent=1 // pred_fallthru
      _
    // Predicated region
    $region26: #{tpu_custom_call.1} parent=1 // pred_check
      _
    $region27: #{tpu_custom_call.1} parent=1 // pred_check_branch
      %380 = sbr.rel (0) target = $region29
    $region28: #{tpu_custom_call.1} parent=1 // pred_region
      %381 = dma.done [#allocation4], 128
    $region29: #{tpu_custom_call.1} parent=1 // pred_fallthru
      _
    %382 = vsyncpa [#allocation3], 1
    %383 = vsyncpa [#allocation6], 1
    %384 = vsyncpa [#allocation4], 1

</llo_original>
